<compile_context>
chip_gen: v6e
topology: v6e:2x2x1
jax: 0.10.0
libtpu: 0.0.40
codegen_flags: <defaults>
</compile_context>

<pallas_src>
import functools

import jax
import jax.numpy as jnp
from jax.experimental import pallas as pl
from jax.experimental.pallas import tpu as pltpu


# ---------------------------------------------------------------------------
# Config (mirrors the PyTorch `config` object shape-wise)
# ---------------------------------------------------------------------------
class Config:
    MODEL = {"input_size": 32, "output_size": 16}
    TRAINING = {"learning_rate": 1e-3}


# ---------------------------------------------------------------------------
# Fused Pallas kernel: y = x @ w + b  and per-tile SSE partials for MSE
# ---------------------------------------------------------------------------
def _fused_kernel(x_ref, w_ref, b_ref, t_ref, y_ref, sse_ref, *,
                  tile_b, batch_size, need_mask):
    # Forward: bf16 (or f32) operands on the MXU, f32 accumulation, f32 bias
    # add — matches nn.Linear semantics.  w/b are grid-resident in VMEM.
    y = jnp.dot(x_ref[...], w_ref[...],
                preferred_element_type=jnp.float32) + b_ref[...]
    y_ref[...] = y.astype(y_ref.dtype)

    # Fused MSE partial for this batch tile.
    d = y - t_ref[...].astype(jnp.float32)
    if need_mask:
        # Short last tile of a cdiv grid: zero rows past the true batch size
        # (OOB target reads are garbage; jnp.where is a select, so they drop).
        row = (pl.program_id(0) * tile_b
               + jax.lax.broadcasted_iota(jnp.int32, d.shape, 0))
        d = jnp.where(row < batch_size, d, 0.0)

    sq = d * d
    f_out = sq.shape[1]
    if tile_b % 8 == 0:
        # Sublane-group partial sums: (tile_b, F) -> (8, F).  Keeps 8 parallel
        # f32 accumulators per lane; no cross-lane XLU reduce on the hot path.
        part = jnp.sum(sq.reshape(tile_b // 8, 8, f_out), axis=0)
    else:
        # Tiny single-tile batch (tile_b == B < 8k): one row + zero padding.
        part = jnp.concatenate(
            [jnp.sum(sq, axis=0, keepdims=True),
             jnp.zeros((7, f_out), jnp.float32)], axis=0)
    sse_ref[...] = part


# ---------------------------------------------------------------------------
# Wrapper
# ---------------------------------------------------------------------------
def _pick_tile_b(B):
    """Large tiles for DMA efficiency, but keep >= 2 grid steps whenever
    possible (double-buffering overlap) and never the whole batch for big B
    (VMEM safety, esp. v7x's 64 MiB)."""
    for t in (1024, 512, 256, 128):
        if B >= 2 * t:
            return t
    if B <= 128:
        return B            # single small block; block dim == array dim is legal
    return 128


@functools.partial(jax.jit, static_argnames=("matmul_dtype",))
def pulse_detector_forward_and_loss(x, w, b, target,
                                    matmul_dtype=jnp.bfloat16):
    """Fused forward (x @ w + b) and MSELoss in a single pallas_call.

    x:      (B, F_in) f32 activations (cast to `matmul_dtype` for the MXU)
    w:      (F_in, F_out) weights (ideally stored pre-cast to `matmul_dtype`)
    b:      (F_out,) f32 bias
    target: (B, F_out) f32
    Returns (y, loss): y (B, F_out) f32, loss scalar f32.
    """
    B, F_in = x.shape
    F_out = w.shape[1]

    x_mx = x.astype(matmul_dtype)     # halves streamed HBM bytes for x
    w_mx = w.astype(matmul_dtype)     # no-op when w is already pre-cast
    b2 = jnp.asarray(b, jnp.float32).reshape(1, F_out)

    tile_b = _pick_tile_b(B)
    num_tiles = pl.cdiv(B, tile_b)
    need_mask = (B % tile_b) != 0

    kernel = functools.partial(_fused_kernel, tile_b=tile_b,
                               batch_size=B, need_mask=need_mask)

    y, sse = pl.pallas_call(
        kernel,
        out_shape=(
            jax.ShapeDtypeStruct((B, F_out), jnp.float32),
            jax.ShapeDtypeStruct((num_tiles * 8, F_out), jnp.float32),
        ),
        grid=(num_tiles,),
        in_specs=[
            pl.BlockSpec((tile_b, F_in), lambda i: (i, 0)),     # x streams
            pl.BlockSpec((F_in, F_out), lambda i: (0, 0)),      # w resident
            pl.BlockSpec((1, F_out), lambda i: (0, 0)),         # b resident
            pl.BlockSpec((tile_b, F_out), lambda i: (i, 0)),    # target streams
        ],
        out_specs=(
            pl.BlockSpec((tile_b, F_out), lambda i: (i, 0)),    # y streams out
            pl.BlockSpec((8, F_out), lambda i: (i, 0)),         # per-tile SSE
        ),
        compiler_params=pltpu.CompilerParams(
            # No carried state across tiles -> batch axis is fully parallel
            # (shards across v7x's two TensorCores; neutral on v5e/v6e).
            dimension_semantics=("parallel",),
        ),
    )(x_mx, w_mx, b2, target)

    # Finalize: tiny cross-tile + cross-lane reduce, mean over TRUE count.
    loss = jnp.sum(sse) * (1.0 / float(B * F_out))
    return y, loss


# ---------------------------------------------------------------------------
# Main
# ---------------------------------------------------------------------------
if __name__ == "__main__":
    cfg = Config()
    F_in = cfg.MODEL["input_size"]
    F_out = cfg.MODEL["output_size"]
    B = 256  # picker -> tile_b=128, grid=(2,): double-buffered 2-step grid

    key = jax.random.PRNGKey(0)
    kx, kw, kb, kt = jax.random.split(key, 4)

    x = jax.random.normal(kx, (B, F_in), dtype=jnp.float32)
    # Canonical parameters: weight stored pre-cast to bf16 (padding/casting
    # hoisted out of the per-call path), bias kept f32.
    w = (jax.random.normal(kw, (F_in, F_out), dtype=jnp.float32)
         * 0.05).astype(jnp.bfloat16)
    b = jax.random.normal(kb, (F_out,), dtype=jnp.float32) * 0.01
    target = jax.random.normal(kt, (B, F_out), dtype=jnp.float32)

    # Fused forward + criterion (single Pallas kernel inside one jit).
    y, loss = pulse_detector_forward_and_loss(x, w, b, target)
    y = jax.block_until_ready(y)
    loss = jax.block_until_ready(loss)

    # Reference with identical operand precision (bf16 MXU operands, f32 acc).
    y_ref = jnp.dot(x.astype(jnp.bfloat16), w,
                    preferred_element_type=jnp.float32) + b[None, :]
    loss_ref = jnp.mean((y_ref - target) ** 2)
    assert jnp.allclose(y, y_ref, atol=1e-4, rtol=1e-4), "forward mismatch"
    assert jnp.allclose(loss, loss_ref, atol=1e-4, rtol=1e-4), "loss mismatch"

    print("KERNEL_OK")
</pallas_src>

<mosaic_0001>
module attributes {stable_mosaic.version = 11 : i64} {
  func.func @_fused_kernel(%arg0: i32, %arg1: memref<128x32xbf16, #tpu.memory_space<vmem>>, %arg2: memref<32x16xbf16, #tpu.memory_space<vmem>>, %arg3: memref<1x16xf32, #tpu.memory_space<vmem>>, %arg4: memref<128x16xf32, #tpu.memory_space<vmem>>, %arg5: memref<128x16xf32, #tpu.memory_space<vmem>>, %arg6: memref<8x16xf32, #tpu.memory_space<vmem>>) attributes {dimension_semantics = [#tpu.dimension_semantics<parallel>], iteration_bounds = array<i64: 2>, scalar_prefetch = 0 : i64, scratch_operands = 0 : i64, tpu.core_type = #tpu.core_type<tc>, window_params = [{transform_indices = @transform_0, window_bounds = array<i64: 128, 32>}, {pipeline_mode = #tpu.pipeline_mode<synchronous>, transform_indices = @transform_1, window_bounds = array<i64: 32, 16>}, {pipeline_mode = #tpu.pipeline_mode<synchronous>, transform_indices = @transform_2, window_bounds = array<i64: 1, 16>}, {transform_indices = @transform_3, window_bounds = array<i64: 128, 16>}, {transform_indices = @transform_4, window_bounds = array<i64: 128, 16>}, {transform_indices = @transform_5, window_bounds = array<i64: 8, 16>}]} {
    %c0 = arith.constant 0 : index
    %c0_0 = arith.constant 0 : index
    %0 = vector.load %arg1[%c0, %c0_0] : memref<128x32xbf16, #tpu.memory_space<vmem>>, vector<128x32xbf16>
    %c0_1 = arith.constant 0 : index
    %c0_2 = arith.constant 0 : index
    %1 = vector.load %arg2[%c0_1, %c0_2] : memref<32x16xbf16, #tpu.memory_space<vmem>>, vector<32x16xbf16>
    %cst = arith.constant dense<0.000000e+00> : vector<128x16xf32>
    %2 = tpu.matmul %0, %1, %cst {dimension_numbers = #tpu.dot_dimension_numbers<[1], [0], [0], [1], [0, 0, 1, 1], [], []>} : vector<128x32xbf16>, vector<32x16xbf16>, vector<128x16xf32> -> vector<128x16xf32>
    %c0_3 = arith.constant 0 : index
    %c0_4 = arith.constant 0 : index
    %3 = vector.load %arg3[%c0_3, %c0_4] : memref<1x16xf32, #tpu.memory_space<vmem>>, vector<1x16xf32>
    %4 = vector.broadcast %3 : vector<1x16xf32> to vector<128x16xf32>
    %5 = arith.addf %2, %4 : vector<128x16xf32>
    %c0_5 = arith.constant 0 : index
    %c0_6 = arith.constant 0 : index
    %6 = vector.load %arg5[%c0_5, %c0_6] : memref<128x16xf32, #tpu.memory_space<vmem>>, vector<128x16xf32>
    tpu.vector_store %arg5[%c0_5, %c0_6], %5 {strides = array<i32>} : memref<128x16xf32, #tpu.memory_space<vmem>>, vector<128x16xf32>,
    %c0_7 = arith.constant 0 : index
    %c0_8 = arith.constant 0 : index
    %7 = vector.load %arg4[%c0_7, %c0_8] : memref<128x16xf32, #tpu.memory_space<vmem>>, vector<128x16xf32>
    %8 = arith.subf %5, %7 : vector<128x16xf32>
    %9 = arith.mulf %8, %8 : vector<128x16xf32>
    %10 = vector.shape_cast %9 : vector<128x16xf32> to vector<16x8x16xf32>
    %cst_9 = arith.constant dense<0.000000e+00> : vector<8x16xf32>
    %11 = vector.multi_reduction <add>, %10, %cst_9 [0] : vector<16x8x16xf32> to vector<8x16xf32>
    %c0_10 = arith.constant 0 : index
    %c0_11 = arith.constant 0 : index
    %12 = vector.load %arg6[%c0_10, %c0_11] : memref<8x16xf32, #tpu.memory_space<vmem>>, vector<8x16xf32>
    tpu.vector_store %arg6[%c0_10, %c0_11], %11 {strides = array<i32>} : memref<8x16xf32, #tpu.memory_space<vmem>>, vector<8x16xf32>,
    return
  }
  func.func @transform_0(%arg0: i32) -> (i32, i32) {
    %c0_i32 = arith.constant 0 : i32
    %c0_i32_0 = arith.constant 0 : i32
    return %arg0, %c0_i32 : i32, i32
  }
  func.func @transform_1(%arg0: i32) -> (i32, i32) {
    %c0_i32 = arith.constant 0 : i32
    %c0_i32_0 = arith.constant 0 : i32
    %c0_i32_1 = arith.constant 0 : i32
    return %c0_i32, %c0_i32_0 : i32, i32
  }
  func.func @transform_2(%arg0: i32) -> (i32, i32) {
    %c0_i32 = arith.constant 0 : i32
    %c0_i32_0 = arith.constant 0 : i32
    %c0_i32_1 = arith.constant 0 : i32
    return %c0_i32, %c0_i32_0 : i32, i32
  }
  func.func @transform_3(%arg0: i32) -> (i32, i32) {
    %c0_i32 = arith.constant 0 : i32
    %c0_i32_0 = arith.constant 0 : i32
    return %arg0, %c0_i32 : i32, i32
  }
  func.func @transform_4(%arg0: i32) -> (i32, i32) {
    %c0_i32 = arith.constant 0 : i32
    %c0_i32_0 = arith.constant 0 : i32
    return %arg0, %c0_i32 : i32, i32
  }
  func.func @transform_5(%arg0: i32) -> (i32, i32) {
    %c0_i32 = arith.constant 0 : i32
    %c0_i32_0 = arith.constant 0 : i32
    return %arg0, %c0_i32 : i32, i32
  }
}

</mosaic_0001>

<llo_original>
// kernel: pulse_detector_forward_and_loss.1
$region0: #{pulse_detector_forward_and_loss.1}
  #allocation0 [shape = 'u32[]', space=smem, size = 0x4, offset = 0x4, fixed_abs, tag = 'smem constant byte address 0x4 - core index']
  #allocation1 [shape = 'u32[144,128]{1,0:T(1,128)}', space=vmem, size = 0x12000, scoped, tag = 'internal scratch']
  %s0 = inlined_call_operand.vmem [shape: bf16[256,32], index: 0, kind: input, shape index: {}]
  %s1 = inlined_call_operand.vmem [shape: bf16[32,16], index: 1, kind: input, shape index: {}]
  %s2 = inlined_call_operand.vmem [shape: f32[1,16], index: 2, kind: input, shape index: {}]
  %s3 = inlined_call_operand.vmem [shape: f32[256,16], index: 3, kind: input, shape index: {}]
  %s4 = inlined_call_operand.vmem [shape: f32[256,16], index: 4, kind: output, shape index: {0}]
  %s5 = inlined_call_operand.vmem [shape: f32[16,16], index: 5, kind: output, shape index: {1}]
  %6 = xla_tuple %s4, %s5
  %s7 = sld [smem:[#allocation0]]
  $region57: #{pulse_detector_forward_and_loss.1} parent=0
    _
  %s9 = ssub.s32 1, %s7
  %s10 = scalar_select 0, %s9, %s7
  loop: start=0, step=1, limit=4
  $region2: #{pulse_detector_forward_and_loss.1} parent=0 // loop_pre_header
    _
  $region3: #{pulse_detector_forward_and_loss.1} parent=0 // loop_header
    %s12 = sphi 0, %s16
    %p13 = scmp.ge.s32.totalorder %s12, 4
    %s22 = sphi 0, %s24
    %s25 = sphi 0, %s22
    %s26 = sphi 0, %s25
    %s42 = sphi 0, %s26
    %s46 = sphi 0, %s46
    %s48 = sphi 0, %s46
    %s49 = sphi 0, %s48
    %s63 = sphi 0, %s49
    %s67 = sphi 0, %s67
    %s69 = sphi 0, %s67
    %s70 = sphi 0, %s69
    %s84 = sphi 0, %s70
    %s90 = sphi 0, %s92
    %s93 = sphi 0, %s90
    %s94 = sphi 0, %s93
    %s110 = sphi 0, %s94
    %s116 = sphi 0, %s118
    %s119 = sphi 0, %s116
    %s120 = sphi 0, %s119
    %s136 = sphi 0, %s120
    %s142 = sphi 0, %s144
    %s145 = sphi 0, %s142
    %s146 = sphi 0, %s145
    %s162 = sphi 0, %s146
  $region4: #{pulse_detector_forward_and_loss.1} parent=0 // loop_header_branch
    %15 = sbr.rel (%p13) target = $region8
  $region5: #{pulse_detector_forward_and_loss.1} parent=0 // loop_body
    %s17 = ssub.s32 %s12, 1
    %s18 = ssub.s32 %s12, 2
    %s19 = sadd.s32 %s12, 1
    %s20 = ssub.s32 %s12, %s19
    %p21 = scmp.eq.s32.totalorder %s20, 0
    %s23 = sadd.s32 %s22, 1
    %s24 = scalar_select %p21, %s22, %s23
    %p27 = pneg %p21
    %p28 = scmp.eq.s32.totalorder %s12, 1
    %p29 = por %p27, %p28
    %p30 = scmp.ne.s32.totalorder %s22, %s25
    %p31 = scmp.eq.s32.totalorder %s12, 0
    %p32 = por %p30, %p31
    %p33 = scmp.ne.s32.totalorder %s22, %s25
    %p34 = scmp.eq.s32.totalorder %s17, 1
    %p35 = por %p33, %p34
    %p36 = scmp.ne.s32.totalorder %s25, %s26
    %p37 = scmp.eq.s32.totalorder %s17, 0
    %p38 = por %p36, %p37
    %p39 = scmp.ne.s32.totalorder %s25, %s26
    %p40 = scmp.eq.s32.totalorder %s18, 1
    %p41 = por %p39, %p40
    %p43 = scmp.ne.s32.totalorder %s26, %s42
    %p44 = scmp.eq.s32.totalorder %s18, 0
    %p45 = por %p43, %p44
    %s47 = sadd.s32 %s46, 1
    %p50 = scmp.eq.s32.totalorder %s12, 1
    %p51 = scmp.ne.s32.totalorder %s46, %s48
    %p52 = scmp.eq.s32.totalorder %s12, 0
    %p53 = por %p51, %p52
    %p54 = scmp.ne.s32.totalorder %s46, %s48
    %p55 = scmp.eq.s32.totalorder %s17, 1
    %p56 = por %p54, %p55
    %p57 = scmp.ne.s32.totalorder %s48, %s49
    %p58 = scmp.eq.s32.totalorder %s17, 0
    %p59 = por %p57, %p58
    %p60 = scmp.ne.s32.totalorder %s48, %s49
    %p61 = scmp.eq.s32.totalorder %s18, 1
    %p62 = por %p60, %p61
    %p64 = scmp.ne.s32.totalorder %s49, %s63
    %p65 = scmp.eq.s32.totalorder %s18, 0
    %p66 = por %p64, %p65
    %s68 = sadd.s32 %s67, 1
    %p71 = scmp.eq.s32.totalorder %s12, 1
    %p72 = scmp.ne.s32.totalorder %s67, %s69
    %p73 = scmp.eq.s32.totalorder %s12, 0
    %p74 = por %p72, %p73
    %p75 = scmp.ne.s32.totalorder %s67, %s69
    %p76 = scmp.eq.s32.totalorder %s17, 1
    %p77 = por %p75, %p76
    %p78 = scmp.ne.s32.totalorder %s69, %s70
    %p79 = scmp.eq.s32.totalorder %s17, 0
    %p80 = por %p78, %p79
    %p81 = scmp.ne.s32.totalorder %s69, %s70
    %p82 = scmp.eq.s32.totalorder %s18, 1
    %p83 = por %p81, %p82
    %p85 = scmp.ne.s32.totalorder %s70, %s84
    %p86 = scmp.eq.s32.totalorder %s18, 0
    %p87 = por %p85, %p86
    %s88 = ssub.s32 %s12, %s19
    %p89 = scmp.eq.s32.totalorder %s88, 0
    %s91 = sadd.s32 %s90, 1
    %s92 = scalar_select %p89, %s90, %s91
    %p95 = pneg %p89
    %p96 = scmp.eq.s32.totalorder %s12, 1
    %p97 = por %p95, %p96
    %p98 = scmp.ne.s32.totalorder %s90, %s93
    %p99 = scmp.eq.s32.totalorder %s12, 0
    %p100 = por %p98, %p99
    %p101 = scmp.ne.s32.totalorder %s90, %s93
    %p102 = scmp.eq.s32.totalorder %s17, 1
    %p103 = por %p101, %p102
    %p104 = scmp.ne.s32.totalorder %s93, %s94
    %p105 = scmp.eq.s32.totalorder %s17, 0
    %p106 = por %p104, %p105
    %p107 = scmp.ne.s32.totalorder %s93, %s94
    %p108 = scmp.eq.s32.totalorder %s18, 1
    %p109 = por %p107, %p108
    %p111 = scmp.ne.s32.totalorder %s94, %s110
    %p112 = scmp.eq.s32.totalorder %s18, 0
    %p113 = por %p111, %p112
    %s114 = ssub.s32 %s12, %s19
    %p115 = scmp.eq.s32.totalorder %s114, 0
    %s117 = sadd.s32 %s116, 1
    %s118 = scalar_select %p115, %s116, %s117
    %p121 = pneg %p115
    %p122 = scmp.eq.s32.totalorder %s12, 1
    %p123 = por %p121, %p122
    %p124 = scmp.ne.s32.totalorder %s116, %s119
    %p125 = scmp.eq.s32.totalorder %s12, 0
    %p126 = por %p124, %p125
    %p127 = scmp.ne.s32.totalorder %s116, %s119
    %p128 = scmp.eq.s32.totalorder %s17, 1
    %p129 = por %p127, %p128
    %p130 = scmp.ne.s32.totalorder %s119, %s120
    %p131 = scmp.eq.s32.totalorder %s17, 0
    %p132 = por %p130, %p131
    %p133 = scmp.ne.s32.totalorder %s119, %s120
    %p134 = scmp.eq.s32.totalorder %s18, 1
    %p135 = por %p133, %p134
    %p137 = scmp.ne.s32.totalorder %s120, %s136
    %p138 = scmp.eq.s32.totalorder %s18, 0
    %p139 = por %p137, %p138
    %s140 = ssub.s32 %s12, %s19
    %p141 = scmp.eq.s32.totalorder %s140, 0
    %s143 = sadd.s32 %s142, 1
    %s144 = scalar_select %p141, %s142, %s143
    %p147 = pneg %p141
    %p148 = scmp.eq.s32.totalorder %s12, 1
    %p149 = por %p147, %p148
    %p150 = scmp.ne.s32.totalorder %s142, %s145
    %p151 = scmp.eq.s32.totalorder %s12, 0
    %p152 = por %p150, %p151
    %p153 = scmp.ne.s32.totalorder %s142, %s145
    %p154 = scmp.eq.s32.totalorder %s17, 1
    %p155 = por %p153, %p154
    %p156 = scmp.ne.s32.totalorder %s145, %s146
    %p157 = scmp.eq.s32.totalorder %s17, 0
    %p158 = por %p156, %p157
    %p159 = scmp.ne.s32.totalorder %s145, %s146
    %p160 = scmp.eq.s32.totalorder %s18, 1
    %p161 = por %p159, %p160
    %p163 = scmp.ne.s32.totalorder %s146, %s162
    %p164 = scmp.eq.s32.totalorder %s18, 0
    %p165 = por %p163, %p164
    %p166 = scmp.le.s32.totalorder 1, %s12
    %p167 = scmp.lt.s32.totalorder %s12, 3
    %p168 = pnand %p166, %p167
    %p169 = pneg %p168
    // Predicated region
    $region9: #{pulse_detector_forward_and_loss.1} parent=5 // pred_check
      _
    $region10: #{pulse_detector_forward_and_loss.1} parent=5 // pred_check_branch
      %171 = sbr.rel (%p168) target = $region12
    $region11: #{pulse_detector_forward_and_loss.1} parent=5 // pred_region
      %s172 = ssub.s32 %s12, 1
      // Predicated region
      $region13: #{pulse_detector_forward_and_loss.1} parent=11 // pred_check
        %p173 = pneg %p59
      $region14: #{pulse_detector_forward_and_loss.1} parent=11 // pred_check_branch
        %175 = sbr.rel (%p173) target = $region16
      $region15: #{pulse_detector_forward_and_loss.1} parent=11 // pred_region
        _
      $region16: #{pulse_detector_forward_and_loss.1} parent=11 // pred_fallthru
        _
      // Predicated region
      $region17: #{pulse_detector_forward_and_loss.1} parent=11 // pred_check
        %p176 = pneg %p80
      $region18: #{pulse_detector_forward_and_loss.1} parent=11 // pred_check_branch
        %178 = sbr.rel (%p176) target = $region20
      $region19: #{pulse_detector_forward_and_loss.1} parent=11 // pred_region
        _
      $region20: #{pulse_detector_forward_and_loss.1} parent=11 // pred_fallthru
        _
    $region12: #{pulse_detector_forward_and_loss.1} parent=5 // pred_fallthru
      _
    %p179 = scmp.lt.s32.totalorder %s12, 2
    // Predicated region
    $region21: #{pulse_detector_forward_and_loss.1} parent=5 // pred_check
      %p180 = pneg %p179
    $region22: #{pulse_detector_forward_and_loss.1} parent=5 // pred_check_branch
      %182 = sbr.rel (%p180) target = $region24
    $region23: #{pulse_detector_forward_and_loss.1} parent=5 // pred_region
      // Predicated region
      $region25: #{pulse_detector_forward_and_loss.1} parent=23 // pred_check
        %p183 = pneg %p32
      $region26: #{pulse_detector_forward_and_loss.1} parent=23 // pred_check_branch
        %185 = sbr.rel (%p183) target = $region28
      $region27: #{pulse_detector_forward_and_loss.1} parent=23 // pred_region
        %s186 = smul.u32 16, %s12
        %p187 = scmp.lt.s32.totalorder %s186, 31
        %s188 = scalar_select %p187, %s186, 31
        %s189 = smul.addr %s188, 4
        %s190 = scalar_lea.vmem %s0, %s189
        %s191 = smul.u32 16, %s12
      $region28: #{pulse_detector_forward_and_loss.1} parent=23 // pred_fallthru
        _
      // Predicated region
      $region29: #{pulse_detector_forward_and_loss.1} parent=23 // pred_check
        %p192 = pneg %p100
      $region30: #{pulse_detector_forward_and_loss.1} parent=23 // pred_check_branch
        %194 = sbr.rel (%p192) target = $region32
      $region31: #{pulse_detector_forward_and_loss.1} parent=23 // pred_region
        %s195 = smul.u32 16, %s12
        %p196 = scmp.lt.s32.totalorder %s195, 31
        %s197 = scalar_select %p196, %s195, 31
        %s198 = smul.addr %s197, 8
        %s199 = scalar_lea.vmem %s3, %s198
        %s200 = smul.u32 16, %s12
      $region32: #{pulse_detector_forward_and_loss.1} parent=23 // pred_fallthru
        _
    $region24: #{pulse_detector_forward_and_loss.1} parent=5 // pred_fallthru
      _
    %p201 = scmp.le.s32.totalorder 1, %s12
    %p202 = scmp.lt.s32.totalorder %s12, 3
    %p203 = pnand %p201, %p202
    %p204 = pneg %p203
    // Predicated region
    $region33: #{pulse_detector_forward_and_loss.1} parent=5 // pred_check
      _
    $region34: #{pulse_detector_forward_and_loss.1} parent=5 // pred_check_branch
      %206 = sbr.rel (%p203) target = $region36
    $region35: #{pulse_detector_forward_and_loss.1} parent=5 // pred_region
      %s207 = ssub.s32 %s12, 1
      %s208 = smul.u32 16, %s17
      %p209 = scmp.lt.s32.totalorder %s208, 31
      %s210 = scalar_select %p209, %s208, 31
      %s211 = smul.addr %s210, 4
      %s212 = scalar_lea.vmem %s0, %s211
      %p213 = pneg %p38
      %p214 = pneg %p35
      %p215 = pneg %p59
      %p216 = pneg %p56
      %p217 = pneg %p80
      %p218 = pneg %p77
      %s219 = smul.u32 16, %s17
      %p220 = scmp.lt.s32.totalorder %s219, 31
      %s221 = scalar_select %p220, %s219, 31
      %s222 = smul.addr %s221, 8
      %s223 = scalar_lea.vmem %s3, %s222
      %p224 = pneg %p106
      %p225 = pneg %p103
      %p226 = pneg %p132
      %p227 = pneg %p129
      %s228 = smul.u32 16, %s17
      %p229 = scmp.lt.s32.totalorder %s228, 31
      %s230 = scalar_select %p229, %s228, 31
      %s231 = smul.addr %s230, 8
      %s232 = scalar_lea.vmem %s4, %s231
      %p233 = pneg %p158
      %p234 = pneg %p155
      %p235 = scmp.lt.s32.totalorder %s17, 1
      %s236 = scalar_select %p235, %s17, 1
      %s237 = smul.addr %s236, 8
      %s238 = scalar_lea.vmem %s5, %s237
      %s239 = smul.u32 16, %s17
      %p240 = scmp.lt.s32.totalorder %s239, 31
      %s241 = scalar_select %p240, %s239, 31
      %s242 = smul.addr %s241, 4
      %s243 = scalar_lea.vmem %s0, %s242
      %s244 = smul.u32 16, %s17
      %s245 = smul.u32 16, %s17
      %p246 = scmp.lt.s32.totalorder %s245, 31
      %s247 = scalar_select %p246, %s245, 31
      %s248 = smul.addr %s247, 8
      %s249 = scalar_lea.vmem %s3, %s248
      %s250 = smul.u32 16, %s17
      %s251 = smul.u32 16, %s17
      %p252 = scmp.lt.s32.totalorder %s251, 31
      %s253 = scalar_select %p252, %s251, 31
      %s254 = smul.addr %s253, 8
      %s255 = scalar_lea.vmem %s4, %s254
      %s256 = smul.u32 16, %s17
      %p257 = scmp.lt.s32.totalorder %s17, 1
      %s258 = scalar_select %p257, %s17, 1
      %s259 = smul.addr %s258, 8
      %s260 = scalar_lea.vmem %s5, %s259
      %v262 = vld [vmem:[%s243] sm:$0xf]
      %v263 = vld [vmem:[%s243 + $0x4] sm:$0xf]
      %v264 = vld [vmem:[%s243 + $0x8] sm:$0xf]
      %v265 = vld [vmem:[%s243 + $0xc] sm:$0xf]
      %v266 = vld [vmem:[%s243 + $0x10] sm:$0xf]
      %v267 = vld [vmem:[%s243 + $0x14] sm:$0xf]
      %v268 = vld [vmem:[%s243 + $0x18] sm:$0xf]
      %v269 = vld [vmem:[%s243 + $0x1c] sm:$0xf]
      %v270 = vld [vmem:[%s243 + $0x20] sm:$0xf]
      %v271 = vld [vmem:[%s243 + $0x24] sm:$0xf]
      %v272 = vld [vmem:[%s243 + $0x28] sm:$0xf]
      %v273 = vld [vmem:[%s243 + $0x2c] sm:$0xf]
      %v274 = vld [vmem:[%s243 + $0x30] sm:$0xf]
      %v275 = vld [vmem:[%s243 + $0x34] sm:$0xf]
      %v276 = vld [vmem:[%s243 + $0x38] sm:$0xf]
      %v277 = vld [vmem:[%s243 + $0x3c] sm:$0xf]
      %v278 = vld [vmem:[%s1] sm:$0xf]
      %v279 = vld [vmem:[%s1 + $0x4] sm:$0xf]
      %v280 = vld [vmem:[%s1 + $0x8] sm:$0xf]
      %v281 = vld [vmem:[%s1 + $0xc] sm:$0xf]
      %v282 = vld [vmem:[%s2] sm:$0x1]
      %v284 = vlaneseq
      %v285 = vshrl.u32 %v284, 7
      %v286 = vsub.s32 0, %v285
      %v287 = vrot.slane %v282, %v286
      %v305 = vunpack.c.l.b16 %v262
      %v306 = vunpack.c.l.b16 %v263
      %v307 = vunpack.c.l.b16 %v264
      %v308 = vunpack.c.l.b16 %v265
      %v309 = vunpack.c.l.b16 %v266
      %v310 = vunpack.c.l.b16 %v267
      %v311 = vunpack.c.l.b16 %v268
      %v312 = vunpack.c.l.b16 %v269
      %v313 = vunpack.c.l.b16 %v270
      %v314 = vunpack.c.l.b16 %v271
      %v315 = vunpack.c.l.b16 %v272
      %v316 = vunpack.c.l.b16 %v273
      %v317 = vunpack.c.l.b16 %v274
      %v318 = vunpack.c.l.b16 %v275
      %v319 = vunpack.c.l.b16 %v276
      %v320 = vunpack.c.l.b16 %v277
      %v321 = vpack.c.b16 %v306, %v305
      %v322 = vpack.c.b16 %v308, %v307
      %v323 = vpack.c.b16 %v310, %v309
      %v324 = vpack.c.b16 %v312, %v311
      %v325 = vpack.c.b16 %v314, %v313
      %v326 = vpack.c.b16 %v316, %v315
      %v327 = vpack.c.b16 %v318, %v317
      %v328 = vpack.c.b16 %v320, %v319
      %v333 = vunpack.c.l.b16 %v278
      %v334 = vunpack.c.l.b16 %v279
      %v335 = vunpack.c.l.b16 %v280
      %v336 = vunpack.c.l.b16 %v281
      %v337 = vpack.c.b16 %v334, %v333
      %v338 = vpack.c.b16 %v336, %v335
      %vm341 = vcmask 261120
      %v343 = vsel %vm341, %v321, 0
      %v346 = vsel %vm341, %v322, 0
      %v349 = vsel %vm341, %v323, 0
      %v352 = vsel %vm341, %v324, 0
      %v355 = vsel %vm341, %v325, 0
      %v358 = vsel %vm341, %v326, 0
      %v361 = vsel %vm341, %v327, 0
      %v364 = vsel %vm341, %v328, 0
      %366 = vmatprep.subr.bf16.mxu0 0
      %367 = vmatpush1.bf16.msra.mxu0 0
      %368 = vmatprep.subr.bf16.mxu0 0
      %369 = vmatpush1.bf16.msra.mxu0 0
      %370 = vmatprep.subr.bf16.mxu0 0
      %371 = vmatpush1.bf16.msra.mxu0 0
      %372 = vmatprep.subr.bf16.mxu0 0
      %373 = vmatpush1.bf16.msra.mxu0 0
      %374 = vmatprep.subr.bf16.mxu0 0
      %375 = vmatpush1.bf16.msra.mxu0 0
      %376 = vmatprep.subr.bf16.mxu0 0
      %377 = vmatpush1.bf16.msra.mxu0 0
      %378 = vmatprep.subr.bf16.mxu0 0
      %379 = vmatpush1.bf16.msra.mxu0 %v338
      %380 = vmatprep.subr.bf16.mxu0 0
      %381 = vmatpush1.bf16.msra.mxu0 %v337
      %382 = vmatprep.subr.bf16.mxu0 0
      %383 = vmatpush2.bf16.msra.mxu0 0
      %384 = vmatprep.subr.bf16.mxu0 0
      %385 = vmatpush2.bf16.msra.mxu0 0
      %386 = vmatprep.subr.bf16.mxu0 0
      %387 = vmatpush2.bf16.msra.mxu0 0
      %388 = vmatprep.subr.bf16.mxu0 0
      %389 = vmatpush2.bf16.msra.mxu0 0
      %390 = vmatprep.subr.bf16.mxu0 0
      %391 = vmatpush2.bf16.msra.mxu0 0
      %392 = vmatprep.subr.bf16.mxu0 0
      %393 = vmatpush2.bf16.msra.mxu0 0
      %394 = vmatprep.subr.bf16.mxu0 0
      %395 = vmatpush2.bf16.msra.mxu0 0
      %396 = vmatprep.subr.bf16.mxu0 0
      %397 = vmatpush2.bf16.msra.mxu0 0
      %398 = vmatprep.mubr.bf16.mxu0 0
      %399 = vmatmul.mubr.bf16.gmra.mxu0 %v343
      %v400 = vpop.f32.mrf.mxu0
      %v401 = vadd.f32 %v287, %v400
      %v402 = vpop.f32.mrf.mxu0
      %v403 = vpop.f32.mrf.mxu0
      %v404 = vadd.f32 %v287, %v403
      %v405 = vpop.f32.mrf.mxu0
      %406 = vmatprep.mubr.bf16.mxu0 0
      %407 = vmatmul.mubr.bf16.gmra.mxu0 %v346
      %v408 = vpop.f32.mrf.mxu0
      %v409 = vadd.f32 %v287, %v408
      %v410 = vpop.f32.mrf.mxu0
      %v411 = vpop.f32.mrf.mxu0
      %v412 = vadd.f32 %v287, %v411
      %v413 = vpop.f32.mrf.mxu0
      %414 = vmatprep.mubr.bf16.mxu0 0
      %415 = vmatmul.mubr.bf16.gmra.mxu0 %v349
      %v416 = vpop.f32.mrf.mxu0
      %v417 = vadd.f32 %v287, %v416
      %v418 = vpop.f32.mrf.mxu0
      %v419 = vpop.f32.mrf.mxu0
      %v420 = vadd.f32 %v287, %v419
      %v421 = vpop.f32.mrf.mxu0
      %422 = vmatprep.mubr.bf16.mxu0 0
      %423 = vmatmul.mubr.bf16.gmra.mxu0 %v352
      %v424 = vpop.f32.mrf.mxu0
      %v425 = vadd.f32 %v287, %v424
      %v426 = vpop.f32.mrf.mxu0
      %v427 = vpop.f32.mrf.mxu0
      %v428 = vadd.f32 %v287, %v427
      %v429 = vpop.f32.mrf.mxu0
      %430 = vmatprep.mubr.bf16.mxu0 0
      %431 = vmatmul.mubr.bf16.gmra.mxu0 %v355
      %v432 = vpop.f32.mrf.mxu0
      %v433 = vadd.f32 %v287, %v432
      %v434 = vpop.f32.mrf.mxu0
      %v435 = vpop.f32.mrf.mxu0
      %v436 = vadd.f32 %v287, %v435
      %v437 = vpop.f32.mrf.mxu0
      %438 = vmatprep.mubr.bf16.mxu0 0
      %439 = vmatmul.mubr.bf16.gmra.mxu0 %v358
      %v440 = vpop.f32.mrf.mxu0
      %v441 = vadd.f32 %v287, %v440
      %v442 = vpop.f32.mrf.mxu0
      %v443 = vpop.f32.mrf.mxu0
      %v444 = vadd.f32 %v287, %v443
      %v445 = vpop.f32.mrf.mxu0
      %446 = vmatprep.mubr.bf16.mxu0 0
      %447 = vmatmul.mubr.bf16.gmra.mxu0 %v361
      %v448 = vpop.f32.mrf.mxu0
      %v449 = vadd.f32 %v287, %v448
      %v450 = vpop.f32.mrf.mxu0
      %v451 = vpop.f32.mrf.mxu0
      %v452 = vadd.f32 %v287, %v451
      %v453 = vpop.f32.mrf.mxu0
      %454 = vmatprep.mubr.bf16.mxu0 0
      %455 = vmatmul.mubr.bf16.gmra.mxu0 %v364
      %v456 = vpop.f32.mrf.mxu0
      %v457 = vadd.f32 %v287, %v456
      %v458 = vpop.f32.mrf.mxu0
      %v459 = vpop.f32.mrf.mxu0
      %v460 = vadd.f32 %v287, %v459
      %v461 = vpop.f32.mrf.mxu0
      %462 = vdwg.mxu0
      %vm463 = vcmask 130048
      %464 = vst.msk [vmem:[%s255] sm:$0xff] %vm463, %v401
      %465 = vst.msk [vmem:[%s255 + $0x8] sm:$0xff] %vm463, %v404
      %466 = vst.msk [vmem:[%s255 + $0x10] sm:$0xff] %vm463, %v409
      %467 = vst.msk [vmem:[%s255 + $0x18] sm:$0xff] %vm463, %v412
      %468 = vst.msk [vmem:[%s255 + $0x20] sm:$0xff] %vm463, %v417
      %469 = vst.msk [vmem:[%s255 + $0x28] sm:$0xff] %vm463, %v420
      %470 = vst.msk [vmem:[%s255 + $0x30] sm:$0xff] %vm463, %v425
      %471 = vst.msk [vmem:[%s255 + $0x38] sm:$0xff] %vm463, %v428
      %472 = vst.msk [vmem:[%s255 + $0x40] sm:$0xff] %vm463, %v433
      %473 = vst.msk [vmem:[%s255 + $0x48] sm:$0xff] %vm463, %v436
      %474 = vst.msk [vmem:[%s255 + $0x50] sm:$0xff] %vm463, %v441
      %475 = vst.msk [vmem:[%s255 + $0x58] sm:$0xff] %vm463, %v444
      %476 = vst.msk [vmem:[%s255 + $0x60] sm:$0xff] %vm463, %v449
      %477 = vst.msk [vmem:[%s255 + $0x68] sm:$0xff] %vm463, %v452
      %478 = vst.msk [vmem:[%s255 + $0x70] sm:$0xff] %vm463, %v457
      %479 = vst.msk [vmem:[%s255 + $0x78] sm:$0xff] %vm463, %v460
      %v480 = vld [vmem:[%s249] sm:$0xff]
      %v481 = vld [vmem:[%s249 + $0x8] sm:$0xff]
      %v482 = vld [vmem:[%s249 + $0x10] sm:$0xff]
      %v483 = vld [vmem:[%s249 + $0x18] sm:$0xff]
      %v484 = vld [vmem:[%s249 + $0x20] sm:$0xff]
      %v485 = vld [vmem:[%s249 + $0x28] sm:$0xff]
      %v486 = vld [vmem:[%s249 + $0x30] sm:$0xff]
      %v487 = vld [vmem:[%s249 + $0x38] sm:$0xff]
      %v488 = vld [vmem:[%s249 + $0x40] sm:$0xff]
      %v489 = vld [vmem:[%s249 + $0x48] sm:$0xff]
      %v490 = vld [vmem:[%s249 + $0x50] sm:$0xff]
      %v491 = vld [vmem:[%s249 + $0x58] sm:$0xff]
      %v492 = vld [vmem:[%s249 + $0x60] sm:$0xff]
      %v493 = vld [vmem:[%s249 + $0x68] sm:$0xff]
      %v494 = vld [vmem:[%s249 + $0x70] sm:$0xff]
      %v495 = vld [vmem:[%s249 + $0x78] sm:$0xff]
      %v496 = vsub.f32 %v401, %v480
      %v497 = vsub.f32 %v404, %v481
      %v498 = vsub.f32 %v409, %v482
      %v499 = vsub.f32 %v412, %v483
      %v500 = vsub.f32 %v417, %v484
      %v501 = vsub.f32 %v420, %v485
      %v502 = vsub.f32 %v425, %v486
      %v503 = vsub.f32 %v428, %v487
      %v504 = vsub.f32 %v433, %v488
      %v505 = vsub.f32 %v436, %v489
      %v506 = vsub.f32 %v441, %v490
      %v507 = vsub.f32 %v444, %v491
      %v508 = vsub.f32 %v449, %v492
      %v509 = vsub.f32 %v452, %v493
      %v510 = vsub.f32 %v457, %v494
      %v511 = vsub.f32 %v460, %v495
      %v512 = vmul.f32 %v496, %v496
      %v513 = vmul.f32 %v497, %v497
      %v514 = vmul.f32 %v498, %v498
      %v515 = vmul.f32 %v499, %v499
      %v516 = vmul.f32 %v500, %v500
      %v517 = vmul.f32 %v501, %v501
      %v518 = vmul.f32 %v502, %v502
      %v519 = vmul.f32 %v503, %v503
      %v520 = vmul.f32 %v504, %v504
      %v521 = vmul.f32 %v505, %v505
      %v522 = vmul.f32 %v506, %v506
      %v523 = vmul.f32 %v507, %v507
      %v524 = vmul.f32 %v508, %v508
      %v525 = vmul.f32 %v509, %v509
      %v526 = vmul.f32 %v510, %v510
      %v527 = vmul.f32 %v511, %v511
      %v528 = vsel %vm463, %v512, 0.0
      %v529 = vsel %vm463, %v513, 0.0
      %v530 = vadd.f32 %v528, %v529
      %v531 = vsel %vm463, %v514, 0.0
      %v532 = vadd.f32 %v530, %v531
      %v533 = vsel %vm463, %v515, 0.0
      %v534 = vadd.f32 %v532, %v533
      %v535 = vsel %vm463, %v516, 0.0
      %v536 = vadd.f32 %v534, %v535
      %v537 = vsel %vm463, %v517, 0.0
      %v538 = vadd.f32 %v536, %v537
      %v539 = vsel %vm463, %v518, 0.0
      %v540 = vadd.f32 %v538, %v539
      %v541 = vsel %vm463, %v519, 0.0
      %v542 = vadd.f32 %v540, %v541
      %v543 = vsel %vm463, %v520, 0.0
      %v544 = vadd.f32 %v542, %v543
      %v545 = vsel %vm463, %v521, 0.0
      %v546 = vadd.f32 %v544, %v545
      %v547 = vsel %vm463, %v522, 0.0
      %v548 = vadd.f32 %v546, %v547
      %v549 = vsel %vm463, %v523, 0.0
      %v550 = vadd.f32 %v548, %v549
      %v551 = vsel %vm463, %v524, 0.0
      %v552 = vadd.f32 %v550, %v551
      %v553 = vsel %vm463, %v525, 0.0
      %v554 = vadd.f32 %v552, %v553
      %v555 = vsel %vm463, %v526, 0.0
      %v556 = vadd.f32 %v554, %v555
      %v557 = vsel %vm463, %v527, 0.0
      %v558 = vadd.f32 %v556, %v557
      %559 = vst.msk [vmem:[%s260] sm:$0xff] %vm463, %v558
      %s560 = smul.u32 16, %s17
      %p561 = scmp.lt.s32.totalorder %s560, 31
      %s562 = scalar_select %p561, %s560, 31
      %s563 = smul.addr %s562, 8
      %s564 = scalar_lea.vmem %s4, %s563
      %p565 = scmp.lt.s32.totalorder %s17, 1
      %s566 = scalar_select %p565, %s17, 1
      %s567 = smul.addr %s566, 8
      %s568 = scalar_lea.vmem %s5, %s567
      // Predicated region
      $region37: #{pulse_detector_forward_and_loss.1} parent=35 // pred_check
        %p569 = pneg %p129
      $region38: #{pulse_detector_forward_and_loss.1} parent=35 // pred_check_branch
        %571 = sbr.rel (%p569) target = $region40
      $region39: #{pulse_detector_forward_and_loss.1} parent=35 // pred_region
        %s572 = smul.u32 16, %s17
      $region40: #{pulse_detector_forward_and_loss.1} parent=35 // pred_fallthru
        _
      // Predicated region
      $region41: #{pulse_detector_forward_and_loss.1} parent=35 // pred_check
        %p573 = pneg %p155
      $region42: #{pulse_detector_forward_and_loss.1} parent=35 // pred_check_branch
        %575 = sbr.rel (%p573) target = $region44
      $region43: #{pulse_detector_forward_and_loss.1} parent=35 // pred_region
        _
      $region44: #{pulse_detector_forward_and_loss.1} parent=35 // pred_fallthru
        _
    $region36: #{pulse_detector_forward_and_loss.1} parent=5 // pred_fallthru
      _
    %p576 = scmp.le.s32.totalorder 2, %s12
    // Predicated region
    $region45: #{pulse_detector_forward_and_loss.1} parent=5 // pred_check
      %p577 = pneg %p576
    $region46: #{pulse_detector_forward_and_loss.1} parent=5 // pred_check_branch
      %579 = sbr.rel (%p577) target = $region48
    $region47: #{pulse_detector_forward_and_loss.1} parent=5 // pred_region
      %s580 = ssub.s32 %s12, 2
      // Predicated region
      $region49: #{pulse_detector_forward_and_loss.1} parent=47 // pred_check
        %p581 = pneg %p135
      $region50: #{pulse_detector_forward_and_loss.1} parent=47 // pred_check_branch
        %583 = sbr.rel (%p581) target = $region52
      $region51: #{pulse_detector_forward_and_loss.1} parent=47 // pred_region
        %s584 = smul.u32 16, %s18
        %p585 = scmp.lt.s32.totalorder %s584, 31
        %s586 = scalar_select %p585, %s584, 31
        %s587 = smul.addr %s586, 8
        %s588 = scalar_lea.vmem %s4, %s587
      $region52: #{pulse_detector_forward_and_loss.1} parent=47 // pred_fallthru
        _
      // Predicated region
      $region53: #{pulse_detector_forward_and_loss.1} parent=47 // pred_check
        %p589 = pneg %p161
      $region54: #{pulse_detector_forward_and_loss.1} parent=47 // pred_check_branch
        %591 = sbr.rel (%p589) target = $region56
      $region55: #{pulse_detector_forward_and_loss.1} parent=47 // pred_region
        %p592 = scmp.lt.s32.totalorder %s18, 1
        %s593 = scalar_select %p592, %s18, 1
        %s594 = smul.addr %s593, 8
        %s595 = scalar_lea.vmem %s5, %s594
      $region56: #{pulse_detector_forward_and_loss.1} parent=47 // pred_fallthru
        _
    $region48: #{pulse_detector_forward_and_loss.1} parent=5 // pred_fallthru
      _
  $region6: #{pulse_detector_forward_and_loss.1} parent=0 // loop_footer
    %s16 = sadd.s32 1, %s12
  $region7: #{pulse_detector_forward_and_loss.1} parent=0 // loop_footer_branch
    %11 = sbr.rel target = $region3
  $region8: #{pulse_detector_forward_and_loss.1} parent=0 // loop_exit
    _

</llo_original>
